<compile_context>
chip_gen: v7x
topology: tpu7x:2x2x1
jax: 0.10.0
libtpu: 0.0.40
codegen_flags: <defaults>
</compile_context>

<pallas_src>
import jax
import jax.numpy as jnp
from jax.experimental import pallas as pl
from jax.experimental.pallas import tpu as pltpu

EPS = 1e-5  # torch.nn.LayerNorm default


def _make_add_layernorm_kernel(G, H, eps):
    """Kernel factory. Blocks are (tile_rows, W) with W = G*H.

    G > 1 means G logical rows of width H are packed along the 128-wide lane
    axis; per-row statistics are computed with a (W,G) ones-reduce matmul and
    a (G,W) ones-expand matmul on the MXU so loads/stores stay lane-dense.
    The add(x, x) is folded into the constants (2/H, 4/H, 2*scale).
    """
    two_over_h = 2.0 / float(H)
    four_over_h = 4.0 / float(H)

    if G == 1:

        def kernel(x_ref, w_ref, b_ref, o_ref):
            x = x_ref[...].astype(jnp.float32)
            # Stats of xx = 2x, without materializing xx.
            mean = jnp.sum(x, axis=-1, keepdims=True) * two_over_h
            meansq = jnp.sum(x * x, axis=-1, keepdims=True) * four_over_h
            var = meansq - mean * mean
            scale = jax.lax.rsqrt(var + eps) * w_ref[...].astype(jnp.float32)
            shift = b_ref[...].astype(jnp.float32) - mean * scale
            # xx*scale + shift == x*(2*scale) + shift
            o_ref[...] = (x * (2.0 * scale) + shift).astype(o_ref.dtype)

        return kernel

    def kernel(x_ref, w_ref, b_ref, red_ref, exp_ref, o_ref):
        x = x_ref[...].astype(jnp.float32)
        red = red_ref[...]                      # (W, G) segment ones (resident)
        exp = exp_ref[...]                      # (G, W) segment ones (resident)
        # Per-logical-row (width H) sums: reduce to (T, G), scale the small
        # (T, G) tensors, then expand back to (T, W) on the MXU.
        s1 = jnp.dot(x, red, preferred_element_type=jnp.float32)
        s2 = jnp.dot(x * x, red, preferred_element_type=jnp.float32)
        mean = jnp.dot(s1 * two_over_h, exp, preferred_element_type=jnp.float32)
        meansq = jnp.dot(s2 * four_over_h, exp, preferred_element_type=jnp.float32)
        var = meansq - mean * mean
        scale = jax.lax.rsqrt(var + eps) * w_ref[...].astype(jnp.float32)
        shift = b_ref[...].astype(jnp.float32) - mean * scale
        o_ref[...] = (x * (2.0 * scale) + shift).astype(o_ref.dtype)

    return kernel


def _round_up(a, b):
    return ((a + b - 1) // b) * b


def add_then_layernorm(x, weight, bias, *, eps=EPS):
    """xx = x + x; LayerNorm(xx) over the last dim with affine weight/bias."""
    orig_shape = x.shape
    H = orig_shape[-1]
    x2 = x.reshape(-1, H)
    R = x2.shape[0]

    # --- lane packing: make the last (lane) dim dense when H < 128 ----------
    if H < 128 and 128 % H == 0:
        G = 128 // H
    else:
        G = 1

    # Pad rows so the lane-packed path always applies (padded rows are zeros,
    # produce finite values, and are sliced off below).
    R_pad = R
    if G > 1 and R % G != 0:
        R_pad = _round_up(R, G)
        x2 = jnp.pad(x2, ((0, R_pad - R), (0, 0)))

    W = G * H
    R_phys = R_pad // G
    x_phys = x2.reshape(R_phys, W)
    w_phys = jnp.tile(weight.reshape(1, H), (1, G))
    b_phys = jnp.tile(bias.reshape(1, H), (1, G))

    # --- dtype-aware row tiling sized against a VMEM budget ------------------
    itemsize = jnp.dtype(x.dtype).itemsize
    base = {4: 8, 2: 16, 1: 32}.get(itemsize, 8)   # sublane packing granule

    # Conservative defaults that are safe on v7x (64 MiB physical VMEM);
    # bump on 128 MiB parts (v5e/v6e) for large hidden sizes.
    vmem_budget = 12 * 1024 * 1024
    vmem_limit = 32 * 1024 * 1024
    try:
        if pltpu.get_tpu_info().vmem_capacity_bytes >= 128 * 1024 * 1024:
            vmem_budget = 28 * 1024 * 1024
            vmem_limit = 64 * 1024 * 1024
    except Exception:
        pass

    # Per block-row bytes: input + output, double-buffered, in the i/o dtype,
    # plus a few f32 intermediates for the live block.
    bytes_per_row = 4 * W * itemsize + 3 * W * 4
    tile_rows = vmem_budget // max(bytes_per_row, 1)
    tile_rows = max(base, min(4096, (tile_rows // base) * base))

    if R_phys <= base:
        tile_rows = R_phys                     # single block == full array dim
    else:
        # Keep the grid >= 2 blocks when the whole array would otherwise fit
        # in one block (dual TensorCore on v7x with "parallel" semantics).
        half = max(base, _round_up(pl.cdiv(R_phys, 2), base))
        tile_rows = min(tile_rows, half)
    grid_rows = pl.cdiv(R_phys, tile_rows)     # ragged last block is masked

    kernel = _make_add_layernorm_kernel(G, H, eps)

    in_specs = [
        pl.BlockSpec((tile_rows, W), lambda i: (i, 0)),
        pl.BlockSpec((1, W), lambda i: (0, 0)),
        pl.BlockSpec((1, W), lambda i: (0, 0)),
    ]
    args = [x_phys, w_phys, b_phys]
    if G > 1:
        # Segment reduce / expand ones matrices, passed as resident inputs
        # (constant index_map -> fetched once, no per-step rebuild).
        seg_of = jnp.arange(W, dtype=jnp.int32) // H
        red = (seg_of[:, None] == jnp.arange(G, dtype=jnp.int32)[None, :]).astype(
            jnp.float32
        )                                       # (W, G)
        exp = red.T                             # (G, W)
        in_specs += [
            pl.BlockSpec((W, G), lambda i: (0, 0)),
            pl.BlockSpec((G, W), lambda i: (0, 0)),
        ]
        args += [red, exp]

    out = pl.pallas_call(
        kernel,
        out_shape=jax.ShapeDtypeStruct((R_phys, W), x.dtype),
        grid_spec=pltpu.PrefetchScalarGridSpec(
            num_scalar_prefetch=0,
            grid=(grid_rows,),
            in_specs=in_specs,
            out_specs=pl.BlockSpec((tile_rows, W), lambda i: (i, 0)),
        ),
        compiler_params=pltpu.CompilerParams(
            dimension_semantics=("parallel",),   # both TCs on v7x
            vmem_limit_bytes=vmem_limit,
        ),
    )(*args)

    out = out.reshape(R_pad, H)
    if R_pad != R:
        out = out[:R]
    return out.reshape(orig_shape)


def _reference(x, weight, bias, eps=EPS):
    xx = x + x
    mean = jnp.mean(xx, axis=-1, keepdims=True)
    var = jnp.mean((xx - mean) ** 2, axis=-1, keepdims=True)
    return (xx - mean) * jax.lax.rsqrt(var + eps) * weight + bias


if __name__ == "__main__":
    key = jax.random.PRNGKey(0)
    k1, k2, k3 = jax.random.split(key, 3)

    # Main case, consistent with the module: (batch=2, seq=8, hidden=32),
    # LayerNorm(normalized_shape=32).  Exercises the lane-packed (G=4) path.
    B, S, H = 2, 8, 32
    x = jax.random.normal(k1, (B, S, H), dtype=jnp.float32)
    weight = 1.0 + 0.01 * jnp.arange(H, dtype=jnp.float32)
    bias = 0.1 * jnp.sin(jnp.arange(H, dtype=jnp.float32))

    y = jax.block_until_ready(add_then_layernorm(x, weight, bias))
    ref = _reference(x, weight, bias)
    assert jnp.allclose(y, ref, atol=1e-4, rtol=1e-4), "mismatch (H=32 packed path)"

    # Lane-dense H (G=1 path) with a ragged row count (grid of 2, masked tail).
    B2, S2, H2 = 3, 5, 128
    x2 = jax.random.normal(k2, (B2, S2, H2), dtype=jnp.float32)
    w2 = 1.0 - 0.005 * jnp.arange(H2, dtype=jnp.float32)
    b2 = 0.05 * jnp.cos(jnp.arange(H2, dtype=jnp.float32))
    y2 = jax.block_until_ready(add_then_layernorm(x2, w2, b2))
    ref2 = _reference(x2, w2, b2)
    assert jnp.allclose(y2, ref2, atol=1e-4, rtol=1e-4), "mismatch (H=128 path)"

    # Lane-packed path with row padding (R not a multiple of 128//H).
    B3, S3, H3 = 1, 5, 32
    x3 = jax.random.normal(k3, (B3, S3, H3), dtype=jnp.float32)
    y3 = jax.block_until_ready(add_then_layernorm(x3, weight, bias))
    ref3 = _reference(x3, weight, bias)
    assert jnp.allclose(y3, ref3, atol=1e-4, rtol=1e-4), "mismatch (padded path)"

    print("KERNEL_OK")
</pallas_src>

<mosaic_0001>
module attributes {stable_mosaic.version = 11 : i64} {
  func.func @kernel(%arg0: i32, %arg1: memref<4x128xf32, #tpu.memory_space<vmem>>, %arg2: memref<1x128xf32, #tpu.memory_space<vmem>>, %arg3: memref<1x128xf32, #tpu.memory_space<vmem>>, %arg4: memref<128x4xf32, #tpu.memory_space<vmem>>, %arg5: memref<4x128xf32, #tpu.memory_space<vmem>>, %arg6: memref<4x128xf32, #tpu.memory_space<vmem>>) attributes {dimension_semantics = [#tpu.dimension_semantics<parallel>], iteration_bounds = array<i64: 1>, scalar_prefetch = 0 : i64, scratch_operands = 0 : i64, tpu.core_type = #tpu.core_type<tc>, window_params = [{transform_indices = @transform_0, window_bounds = array<i64: 4, 128>}, {pipeline_mode = #tpu.pipeline_mode<synchronous>, transform_indices = @transform_1, window_bounds = array<i64: 1, 128>}, {pipeline_mode = #tpu.pipeline_mode<synchronous>, transform_indices = @transform_2, window_bounds = array<i64: 1, 128>}, {pipeline_mode = #tpu.pipeline_mode<synchronous>, transform_indices = @transform_3, window_bounds = array<i64: 128, 4>}, {pipeline_mode = #tpu.pipeline_mode<synchronous>, transform_indices = @transform_4, window_bounds = array<i64: 4, 128>}, {transform_indices = @transform_5, window_bounds = array<i64: 4, 128>}]} {
    %c0 = arith.constant 0 : index
    %c0_0 = arith.constant 0 : index
    %0 = vector.load %arg1[%c0, %c0_0] : memref<4x128xf32, #tpu.memory_space<vmem>>, vector<4x128xf32>
    %c0_1 = arith.constant 0 : index
    %c0_2 = arith.constant 0 : index
    %1 = vector.load %arg4[%c0_1, %c0_2] : memref<128x4xf32, #tpu.memory_space<vmem>>, vector<128x4xf32>
    %c0_3 = arith.constant 0 : index
    %c0_4 = arith.constant 0 : index
    %2 = vector.load %arg5[%c0_3, %c0_4] : memref<4x128xf32, #tpu.memory_space<vmem>>, vector<4x128xf32>
    %cst = arith.constant dense<0.000000e+00> : vector<4x4xf32>
    %3 = tpu.matmul %0, %1, %cst {dimension_numbers = #tpu.dot_dimension_numbers<[1], [0], [0], [1], [0, 0, 1, 1], [], []>} : vector<4x128xf32>, vector<128x4xf32>, vector<4x4xf32> -> vector<4x4xf32>
    %4 = arith.mulf %0, %0 : vector<4x128xf32>
    %cst_5 = arith.constant dense<0.000000e+00> : vector<4x4xf32>
    %5 = tpu.matmul %4, %1, %cst_5 {dimension_numbers = #tpu.dot_dimension_numbers<[1], [0], [0], [1], [0, 0, 1, 1], [], []>} : vector<4x128xf32>, vector<128x4xf32>, vector<4x4xf32> -> vector<4x4xf32>
    %cst_6 = arith.constant 6.250000e-02 : f32
    %6 = vector.broadcast %cst_6 : f32 to vector<4x4xf32>
    %7 = arith.mulf %3, %6 : vector<4x4xf32>
    %cst_7 = arith.constant dense<0.000000e+00> : vector<4x128xf32>
    %8 = tpu.matmul %7, %2, %cst_7 {dimension_numbers = #tpu.dot_dimension_numbers<[1], [0], [0], [1], [0, 0, 1, 1], [], []>} : vector<4x4xf32>, vector<4x128xf32>, vector<4x128xf32> -> vector<4x128xf32>
    %cst_8 = arith.constant 1.250000e-01 : f32
    %9 = vector.broadcast %cst_8 : f32 to vector<4x4xf32>
    %10 = arith.mulf %5, %9 : vector<4x4xf32>
    %cst_9 = arith.constant dense<0.000000e+00> : vector<4x128xf32>
    %11 = tpu.matmul %10, %2, %cst_9 {dimension_numbers = #tpu.dot_dimension_numbers<[1], [0], [0], [1], [0, 0, 1, 1], [], []>} : vector<4x4xf32>, vector<4x128xf32>, vector<4x128xf32> -> vector<4x128xf32>
    %12 = arith.mulf %8, %8 : vector<4x128xf32>
    %13 = arith.subf %11, %12 : vector<4x128xf32>
    %cst_10 = arith.constant 9.99999974E-6 : f32
    %14 = vector.broadcast %cst_10 : f32 to vector<4x128xf32>
    %15 = arith.addf %13, %14 : vector<4x128xf32>
    %16 = math.rsqrt %15 : vector<4x128xf32>
    %c0_11 = arith.constant 0 : index
    %c0_12 = arith.constant 0 : index
    %17 = vector.load %arg2[%c0_11, %c0_12] : memref<1x128xf32, #tpu.memory_space<vmem>>, vector<1x128xf32>
    %18 = vector.broadcast %17 : vector<1x128xf32> to vector<4x128xf32>
    %19 = arith.mulf %16, %18 : vector<4x128xf32>
    %c0_13 = arith.constant 0 : index
    %c0_14 = arith.constant 0 : index
    %20 = vector.load %arg3[%c0_13, %c0_14] : memref<1x128xf32, #tpu.memory_space<vmem>>, vector<1x128xf32>
    %21 = arith.mulf %8, %19 : vector<4x128xf32>
    %22 = vector.broadcast %20 : vector<1x128xf32> to vector<4x128xf32>
    %23 = arith.subf %22, %21 : vector<4x128xf32>
    %cst_15 = arith.constant 2.000000e+00 : f32
    %24 = vector.broadcast %cst_15 : f32 to vector<4x128xf32>
    %25 = arith.mulf %24, %19 : vector<4x128xf32>
    %26 = arith.mulf %0, %25 : vector<4x128xf32>
    %27 = arith.addf %26, %23 : vector<4x128xf32>
    %c0_16 = arith.constant 0 : index
    %c0_17 = arith.constant 0 : index
    %28 = vector.load %arg6[%c0_16, %c0_17] : memref<4x128xf32, #tpu.memory_space<vmem>>, vector<4x128xf32>
    tpu.vector_store %arg6[%c0_16, %c0_17], %27 {strides = array<i32>} : memref<4x128xf32, #tpu.memory_space<vmem>>, vector<4x128xf32>,
    return
  }
  func.func @transform_0(%arg0: i32) -> (i32, i32) {
    %c0_i32 = arith.constant 0 : i32
    %c0_i32_0 = arith.constant 0 : i32
    return %arg0, %c0_i32 : i32, i32
  }
  func.func @transform_1(%arg0: i32) -> (i32, i32) {
    %c0_i32 = arith.constant 0 : i32
    %c0_i32_0 = arith.constant 0 : i32
    %c0_i32_1 = arith.constant 0 : i32
    return %c0_i32, %c0_i32_0 : i32, i32
  }
  func.func @transform_2(%arg0: i32) -> (i32, i32) {
    %c0_i32 = arith.constant 0 : i32
    %c0_i32_0 = arith.constant 0 : i32
    %c0_i32_1 = arith.constant 0 : i32
    return %c0_i32, %c0_i32_0 : i32, i32
  }
  func.func @transform_3(%arg0: i32) -> (i32, i32) {
    %c0_i32 = arith.constant 0 : i32
    %c0_i32_0 = arith.constant 0 : i32
    %c0_i32_1 = arith.constant 0 : i32
    return %c0_i32, %c0_i32_0 : i32, i32
  }
  func.func @transform_4(%arg0: i32) -> (i32, i32) {
    %c0_i32 = arith.constant 0 : i32
    %c0_i32_0 = arith.constant 0 : i32
    %c0_i32_1 = arith.constant 0 : i32
    return %c0_i32, %c0_i32_0 : i32, i32
  }
  func.func @transform_5(%arg0: i32) -> (i32, i32) {
    %c0_i32 = arith.constant 0 : i32
    %c0_i32_0 = arith.constant 0 : i32
    return %arg0, %c0_i32 : i32, i32
  }
}

</mosaic_0001>

<llo_original>
// kernel: tpu_custom_call.1
$region0: #{tpu_custom_call.1}
  #allocation0 [shape = 'u32[]', space=smem, size = 0x4, offset = 0x4, fixed_abs, tag = 'smem constant byte address 0x4 - core index']
  #allocation1 [shape = 'u32[144,128]{1,0:T(1,128)}', space=vmem, size = 0x12000, scoped, tag = 'internal scratch']
  %s0 = inlined_call_operand.vmem [shape: f32[4,128], index: 0, kind: input, shape index: {}]
  %s1 = inlined_call_operand.vmem [shape: f32[1,128], index: 1, kind: input, shape index: {}]
  %s2 = inlined_call_operand.vmem [shape: f32[1,128], index: 2, kind: input, shape index: {}]
  %s3 = inlined_call_operand.vmem [shape: f32[128,4], index: 3, kind: input, shape index: {}]
  %s4 = inlined_call_operand.vmem [shape: f32[4,128], index: 4, kind: input, shape index: {}]
  %s5 = inlined_call_operand.hbm [shape: f32[4,128], index: 5, kind: output, shape index: {}]
  %s6 = sld [smem:[#allocation0]]
  $region30: #{tpu_custom_call.1} parent=0
    _
  %s8 = ssub.s32 1, %s6
  %s9 = scalar_select 0, %s8, %s6
  $region1: #{tpu_custom_call.1} parent=0
    #allocation2 [shape = 'u8[2048]{0}', space=vmem, size = 0x800, scoped, tag = 'output window, operand 0, single buffered']
    #allocation3 [shape = 's32[1]{0}', space=sflag, size = 0x4, scoped, tag = 'scoped memory for tpu_custom_call.1']
    %10 = vsyncpa [#allocation3], 0
    // Predicated region
    $region2: #{tpu_custom_call.1} parent=1 // pred_check
      _
    $region3: #{tpu_custom_call.1} parent=1 // pred_check_branch
      %12 = sbr.rel (0) target = $region5
    $region4: #{tpu_custom_call.1} parent=1 // pred_region
      _
    $region5: #{tpu_custom_call.1} parent=1 // pred_fallthru
      _
    // Predicated region
    $region6: #{tpu_custom_call.1} parent=1 // pred_check
      _
    $region7: #{tpu_custom_call.1} parent=1 // pred_check_branch
      %14 = sbr.rel (0) target = $region9
    $region8: #{tpu_custom_call.1} parent=1 // pred_region
      _
    $region9: #{tpu_custom_call.1} parent=1 // pred_fallthru
      _
    // Predicated region
    $region10: #{tpu_custom_call.1} parent=1 // pred_check
      _
    $region11: #{tpu_custom_call.1} parent=1 // pred_check_branch
      %16 = sbr.rel (0) target = $region13
    $region12: #{tpu_custom_call.1} parent=1 // pred_region
      _
    $region13: #{tpu_custom_call.1} parent=1 // pred_fallthru
      _
    // Predicated region
    $region14: #{tpu_custom_call.1} parent=1 // pred_check
      _
    $region15: #{tpu_custom_call.1} parent=1 // pred_check_branch
      %18 = sbr.rel (0) target = $region17
    $region16: #{tpu_custom_call.1} parent=1 // pred_region
      _
    $region17: #{tpu_custom_call.1} parent=1 // pred_fallthru
      _
    // Predicated region
    $region18: #{tpu_custom_call.1} parent=1 // pred_check
      _
    $region19: #{tpu_custom_call.1} parent=1 // pred_check_branch
      %20 = sbr.rel (0) target = $region21
    $region20: #{tpu_custom_call.1} parent=1 // pred_region
      _
    $region21: #{tpu_custom_call.1} parent=1 // pred_fallthru
      _
    %v21 = vld [vmem:[%s0] sm:$0xf]
    %v22 = vld [vmem:[%s3] sm:$0xff]
    %v23 = vld [vmem:[%s3 + $0x8] sm:$0xff]
    %v24 = vld [vmem:[%s3 + $0x10] sm:$0xff]
    %v25 = vld [vmem:[%s3 + $0x18] sm:$0xff]
    %v26 = vld [vmem:[%s3 + $0x20] sm:$0xff]
    %v27 = vld [vmem:[%s3 + $0x28] sm:$0xff]
    %v28 = vld [vmem:[%s3 + $0x30] sm:$0xff]
    %v29 = vld [vmem:[%s3 + $0x38] sm:$0xff]
    %v30 = vld [vmem:[%s3 + $0x40] sm:$0xff]
    %v31 = vld [vmem:[%s3 + $0x48] sm:$0xff]
    %v32 = vld [vmem:[%s3 + $0x50] sm:$0xff]
    %v33 = vld [vmem:[%s3 + $0x58] sm:$0xff]
    %v34 = vld [vmem:[%s3 + $0x60] sm:$0xff]
    %v35 = vld [vmem:[%s3 + $0x68] sm:$0xff]
    %v36 = vld [vmem:[%s3 + $0x70] sm:$0xff]
    %v37 = vld [vmem:[%s3 + $0x78] sm:$0xff]
    %v38 = vld [vmem:[%s4] sm:$0xf]
    %39 = vmatprep.subr.mxu0 0.0
    %40 = vmatpush1.msra.mxu0 %v22
    %41 = vmatprep.subr.mxu0 0.0
    %42 = vmatpush1.msra.mxu0 %v23
    %43 = vmatprep.subr.mxu0 0.0
    %44 = vmatpush1.msra.mxu0 %v24
    %45 = vmatprep.subr.mxu0 0.0
    %46 = vmatpush1.msra.mxu0 %v25
    %47 = vmatprep.subr.mxu0 0.0
    %48 = vmatpush1.msra.mxu0 %v26
    %49 = vmatprep.subr.mxu0 0.0
    %50 = vmatpush1.msra.mxu0 %v27
    %51 = vmatprep.subr.mxu0 0.0
    %52 = vmatpush1.msra.mxu0 %v28
    %53 = vmatprep.subr.mxu0 0.0
    %54 = vmatpush1.msra.mxu0 %v29
    %55 = vmatprep.subr.mxu0 0.0
    %56 = vmatpush1.msra.mxu0 %v30
    %57 = vmatprep.subr.mxu0 0.0
    %58 = vmatpush1.msra.mxu0 %v31
    %59 = vmatprep.subr.mxu0 0.0
    %60 = vmatpush1.msra.mxu0 %v32
    %61 = vmatprep.subr.mxu0 0.0
    %62 = vmatpush1.msra.mxu0 %v33
    %63 = vmatprep.subr.mxu0 0.0
    %64 = vmatpush1.msra.mxu0 %v34
    %65 = vmatprep.subr.mxu0 0.0
    %66 = vmatpush1.msra.mxu0 %v35
    %67 = vmatprep.subr.mxu0 0.0
    %68 = vmatpush1.msra.mxu0 %v36
    %69 = vmatprep.subr.mxu0 0.0
    %70 = vmatpush1.msra.mxu0 %v37
    %71 = vmatprep.subr.mxu0 0.0
    %72 = vmatpush1.msra.mxu0 0.0
    %73 = vmatprep.subr.mxu0 0.0
    %74 = vmatpush1.msra.mxu0 0.0
    %75 = vmatprep.subr.mxu0 0.0
    %76 = vmatpush1.msra.mxu0 0.0
    %77 = vmatprep.subr.mxu0 0.0
    %78 = vmatpush1.msra.mxu0 0.0
    %79 = vmatprep.subr.mxu0 0.0
    %80 = vmatpush1.msra.mxu0 0.0
    %81 = vmatprep.subr.mxu0 0.0
    %82 = vmatpush1.msra.mxu0 0.0
    %83 = vmatprep.subr.mxu0 0.0
    %84 = vmatpush1.msra.mxu0 0.0
    %85 = vmatprep.subr.mxu0 0.0
    %86 = vmatpush1.msra.mxu0 0.0
    %87 = vmatprep.subr.mxu0 0.0
    %88 = vmatpush1.msra.mxu0 0.0
    %89 = vmatprep.subr.mxu0 0.0
    %90 = vmatpush1.msra.mxu0 0.0
    %91 = vmatprep.subr.mxu0 0.0
    %92 = vmatpush1.msra.mxu0 0.0
    %93 = vmatprep.subr.mxu0 0.0
    %94 = vmatpush1.msra.mxu0 0.0
    %95 = vmatprep.subr.mxu0 0.0
    %96 = vmatpush1.msra.mxu0 0.0
    %97 = vmatprep.subr.mxu0 0.0
    %98 = vmatpush1.msra.mxu0 0.0
    %99 = vmatprep.subr.mxu0 0.0
    %100 = vmatpush1.msra.mxu0 0.0
    %101 = vmatprep.subr.mxu0 0.0
    %102 = vmatpush1.msra.mxu0 0.0
    %103 = vmatprep.mubr.f32.mxu0 0.0
    %104 = vmatmul.mubr.f32.gmra.mrb[0].mxu0 %v21
    %v105 = vpop.f32.mrb[0].mxu0
    %v106 = vadd.f32 0.0, %v105
    %v107 = vpop.f32.mrb[0].mxu0
    %108 = vdwg.mxu0
    %v109 = vmul.f32 %v21, %v21
    %110 = vmatprep.subr.mxu0 0.0
    %111 = vmatpush1.msra.mxu0 %v22
    %112 = vmatprep.subr.mxu0 0.0
    %113 = vmatpush1.msra.mxu0 %v23
    %114 = vmatprep.subr.mxu0 0.0
    %115 = vmatpush1.msra.mxu0 %v24
    %116 = vmatprep.subr.mxu0 0.0
    %117 = vmatpush1.msra.mxu0 %v25
    %118 = vmatprep.subr.mxu0 0.0
    %119 = vmatpush1.msra.mxu0 %v26
    %120 = vmatprep.subr.mxu0 0.0
    %121 = vmatpush1.msra.mxu0 %v27
    %122 = vmatprep.subr.mxu0 0.0
    %123 = vmatpush1.msra.mxu0 %v28
    %124 = vmatprep.subr.mxu0 0.0
    %125 = vmatpush1.msra.mxu0 %v29
    %126 = vmatprep.subr.mxu0 0.0
    %127 = vmatpush1.msra.mxu0 %v30
    %128 = vmatprep.subr.mxu0 0.0
    %129 = vmatpush1.msra.mxu0 %v31
    %130 = vmatprep.subr.mxu0 0.0
    %131 = vmatpush1.msra.mxu0 %v32
    %132 = vmatprep.subr.mxu0 0.0
    %133 = vmatpush1.msra.mxu0 %v33
    %134 = vmatprep.subr.mxu0 0.0
    %135 = vmatpush1.msra.mxu0 %v34
    %136 = vmatprep.subr.mxu0 0.0
    %137 = vmatpush1.msra.mxu0 %v35
    %138 = vmatprep.subr.mxu0 0.0
    %139 = vmatpush1.msra.mxu0 %v36
    %140 = vmatprep.subr.mxu0 0.0
    %141 = vmatpush1.msra.mxu0 %v37
    %142 = vmatprep.subr.mxu0 0.0
    %143 = vmatpush1.msra.mxu0 0.0
    %144 = vmatprep.subr.mxu0 0.0
    %145 = vmatpush1.msra.mxu0 0.0
    %146 = vmatprep.subr.mxu0 0.0
    %147 = vmatpush1.msra.mxu0 0.0
    %148 = vmatprep.subr.mxu0 0.0
    %149 = vmatpush1.msra.mxu0 0.0
    %150 = vmatprep.subr.mxu0 0.0
    %151 = vmatpush1.msra.mxu0 0.0
    %152 = vmatprep.subr.mxu0 0.0
    %153 = vmatpush1.msra.mxu0 0.0
    %154 = vmatprep.subr.mxu0 0.0
    %155 = vmatpush1.msra.mxu0 0.0
    %156 = vmatprep.subr.mxu0 0.0
    %157 = vmatpush1.msra.mxu0 0.0
    %158 = vmatprep.subr.mxu0 0.0
    %159 = vmatpush1.msra.mxu0 0.0
    %160 = vmatprep.subr.mxu0 0.0
    %161 = vmatpush1.msra.mxu0 0.0
    %162 = vmatprep.subr.mxu0 0.0
    %163 = vmatpush1.msra.mxu0 0.0
    %164 = vmatprep.subr.mxu0 0.0
    %165 = vmatpush1.msra.mxu0 0.0
    %166 = vmatprep.subr.mxu0 0.0
    %167 = vmatpush1.msra.mxu0 0.0
    %168 = vmatprep.subr.mxu0 0.0
    %169 = vmatpush1.msra.mxu0 0.0
    %170 = vmatprep.subr.mxu0 0.0
    %171 = vmatpush1.msra.mxu0 0.0
    %172 = vmatprep.subr.mxu0 0.0
    %173 = vmatpush1.msra.mxu0 0.0
    %174 = vmatprep.mubr.f32.mxu0 0.0
    %175 = vmatmul.mubr.f32.gmra.mrb[0].mxu0 %v109
    %v176 = vpop.f32.mrb[0].mxu0
    %v177 = vadd.f32 0.0, %v176
    %v178 = vpop.f32.mrb[0].mxu0
    %179 = vdwg.mxu0
    %v180 = vmul.f32 %v106, 0.0625
    %vm181 = vcmask 31744
    %v183 = vsel %vm181, %v180, 0
    %vm185 = vcmask 1043456
    %v187 = vsel %vm185, %v38, 0
    %189 = vmatprep.subr.mxu0 0.0
    %190 = vmatpush1.msra.mxu0 %v187
    %191 = vmatprep.subr.mxu0 0.0
    %192 = vmatpush1.msra.mxu0 0.0
    %193 = vmatprep.subr.mxu0 0.0
    %194 = vmatpush1.msra.mxu0 0.0
    %195 = vmatprep.subr.mxu0 0.0
    %196 = vmatpush1.msra.mxu0 0.0
    %197 = vmatprep.subr.mxu0 0.0
    %198 = vmatpush1.msra.mxu0 0.0
    %199 = vmatprep.subr.mxu0 0.0
    %200 = vmatpush1.msra.mxu0 0.0
    %201 = vmatprep.subr.mxu0 0.0
    %202 = vmatpush1.msra.mxu0 0.0
    %203 = vmatprep.subr.mxu0 0.0
    %204 = vmatpush1.msra.mxu0 0.0
    %205 = vmatprep.subr.mxu0 0.0
    %206 = vmatpush1.msra.mxu0 0.0
    %207 = vmatprep.subr.mxu0 0.0
    %208 = vmatpush1.msra.mxu0 0.0
    %209 = vmatprep.subr.mxu0 0.0
    %210 = vmatpush1.msra.mxu0 0.0
    %211 = vmatprep.subr.mxu0 0.0
    %212 = vmatpush1.msra.mxu0 0.0
    %213 = vmatprep.subr.mxu0 0.0
    %214 = vmatpush1.msra.mxu0 0.0
    %215 = vmatprep.subr.mxu0 0.0
    %216 = vmatpush1.msra.mxu0 0.0
    %217 = vmatprep.subr.mxu0 0.0
    %218 = vmatpush1.msra.mxu0 0.0
    %219 = vmatprep.subr.mxu0 0.0
    %220 = vmatpush1.msra.mxu0 0.0
    %221 = vmatprep.subr.mxu0 0.0
    %222 = vmatpush1.msra.mxu0 0.0
    %223 = vmatprep.subr.mxu0 0.0
    %224 = vmatpush1.msra.mxu0 0.0
    %225 = vmatprep.subr.mxu0 0.0
    %226 = vmatpush1.msra.mxu0 0.0
    %227 = vmatprep.subr.mxu0 0.0
    %228 = vmatpush1.msra.mxu0 0.0
    %229 = vmatprep.subr.mxu0 0.0
    %230 = vmatpush1.msra.mxu0 0.0
    %231 = vmatprep.subr.mxu0 0.0
    %232 = vmatpush1.msra.mxu0 0.0
    %233 = vmatprep.subr.mxu0 0.0
    %234 = vmatpush1.msra.mxu0 0.0
    %235 = vmatprep.subr.mxu0 0.0
    %236 = vmatpush1.msra.mxu0 0.0
    %237 = vmatprep.subr.mxu0 0.0
    %238 = vmatpush1.msra.mxu0 0.0
    %239 = vmatprep.subr.mxu0 0.0
    %240 = vmatpush1.msra.mxu0 0.0
    %241 = vmatprep.subr.mxu0 0.0
    %242 = vmatpush1.msra.mxu0 0.0
    %243 = vmatprep.subr.mxu0 0.0
    %244 = vmatpush1.msra.mxu0 0.0
    %245 = vmatprep.subr.mxu0 0.0
    %246 = vmatpush1.msra.mxu0 0.0
    %247 = vmatprep.subr.mxu0 0.0
    %248 = vmatpush1.msra.mxu0 0.0
    %249 = vmatprep.subr.mxu0 0.0
    %250 = vmatpush1.msra.mxu0 0.0
    %251 = vmatprep.subr.mxu0 0.0
    %252 = vmatpush1.msra.mxu0 0.0
    %253 = vmatprep.mubr.f32.mxu0 0.0
    %254 = vmatmul.mubr.f32.gmra.mrb[0].mxu0 %v183
    %v255 = vpop.f32.mrb[0].mxu0
    %v256 = vadd.f32 0.0, %v255
    %v257 = vpop.f32.mrb[0].mxu0
    %258 = vdwg.mxu0
    %v259 = vmul.f32 %v177, 0.125
    %v261 = vsel %vm181, %v259, 0
    %263 = vmatprep.subr.mxu0 0.0
    %264 = vmatpush1.msra.mxu0 %v187
    %265 = vmatprep.subr.mxu0 0.0
    %266 = vmatpush1.msra.mxu0 0.0
    %267 = vmatprep.subr.mxu0 0.0
    %268 = vmatpush1.msra.mxu0 0.0
    %269 = vmatprep.subr.mxu0 0.0
    %270 = vmatpush1.msra.mxu0 0.0
    %271 = vmatprep.subr.mxu0 0.0
    %272 = vmatpush1.msra.mxu0 0.0
    %273 = vmatprep.subr.mxu0 0.0
    %274 = vmatpush1.msra.mxu0 0.0
    %275 = vmatprep.subr.mxu0 0.0
    %276 = vmatpush1.msra.mxu0 0.0
    %277 = vmatprep.subr.mxu0 0.0
    %278 = vmatpush1.msra.mxu0 0.0
    %279 = vmatprep.subr.mxu0 0.0
    %280 = vmatpush1.msra.mxu0 0.0
    %281 = vmatprep.subr.mxu0 0.0
    %282 = vmatpush1.msra.mxu0 0.0
    %283 = vmatprep.subr.mxu0 0.0
    %284 = vmatpush1.msra.mxu0 0.0
    %285 = vmatprep.subr.mxu0 0.0
    %286 = vmatpush1.msra.mxu0 0.0
    %287 = vmatprep.subr.mxu0 0.0
    %288 = vmatpush1.msra.mxu0 0.0
    %289 = vmatprep.subr.mxu0 0.0
    %290 = vmatpush1.msra.mxu0 0.0
    %291 = vmatprep.subr.mxu0 0.0
    %292 = vmatpush1.msra.mxu0 0.0
    %293 = vmatprep.subr.mxu0 0.0
    %294 = vmatpush1.msra.mxu0 0.0
    %295 = vmatprep.subr.mxu0 0.0
    %296 = vmatpush1.msra.mxu0 0.0
    %297 = vmatprep.subr.mxu0 0.0
    %298 = vmatpush1.msra.mxu0 0.0
    %299 = vmatprep.subr.mxu0 0.0
    %300 = vmatpush1.msra.mxu0 0.0
    %301 = vmatprep.subr.mxu0 0.0
    %302 = vmatpush1.msra.mxu0 0.0
    %303 = vmatprep.subr.mxu0 0.0
    %304 = vmatpush1.msra.mxu0 0.0
    %305 = vmatprep.subr.mxu0 0.0
    %306 = vmatpush1.msra.mxu0 0.0
    %307 = vmatprep.subr.mxu0 0.0
    %308 = vmatpush1.msra.mxu0 0.0
    %309 = vmatprep.subr.mxu0 0.0
    %310 = vmatpush1.msra.mxu0 0.0
    %311 = vmatprep.subr.mxu0 0.0
    %312 = vmatpush1.msra.mxu0 0.0
    %313 = vmatprep.subr.mxu0 0.0
    %314 = vmatpush1.msra.mxu0 0.0
    %315 = vmatprep.subr.mxu0 0.0
    %316 = vmatpush1.msra.mxu0 0.0
    %317 = vmatprep.subr.mxu0 0.0
    %318 = vmatpush1.msra.mxu0 0.0
    %319 = vmatprep.subr.mxu0 0.0
    %320 = vmatpush1.msra.mxu0 0.0
    %321 = vmatprep.subr.mxu0 0.0
    %322 = vmatpush1.msra.mxu0 0.0
    %323 = vmatprep.subr.mxu0 0.0
    %324 = vmatpush1.msra.mxu0 0.0
    %325 = vmatprep.subr.mxu0 0.0
    %326 = vmatpush1.msra.mxu0 0.0
    %327 = vmatprep.mubr.f32.mxu0 0.0
    %328 = vmatmul.mubr.f32.gmra.mrb[0].mxu0 %v261
    %v329 = vpop.f32.mrb[0].mxu0
    %v330 = vadd.f32 0.0, %v329
    %v331 = vpop.f32.mrb[0].mxu0
    %332 = vdwg.mxu0
    %v333 = vmul.f32 %v256, %v256
    %v334 = vsub.f32 %v330, %v333
    %v335 = vadd.f32 %v334, 1e-05
    %v336 = vrsqrt.pop %v335
    %v337 = vld [vmem:[%s1] sm:$0x1]
    %v339 = vlaneseq
    %v340 = vshrl.u32 %v339, 7
    %v341 = vsub.s32 0, %v340
    %v342 = vrot.slane %v337, %v341
    %v344 = vmul.f32 %v336, %v342
    %v345 = vld [vmem:[%s2] sm:$0x1]
    %v346 = vmul.f32 %v256, %v344
    %v348 = vlaneseq
    %v349 = vshrl.u32 %v348, 7
    %v350 = vsub.s32 0, %v349
    %v351 = vrot.slane %v345, %v350
    %v353 = vsub.f32 %v351, %v346
    %v354 = vmul.f32 %v344, 2.0
    %v355 = vmul.f32 %v21, %v354
    %v356 = vadd.f32 %v355, %v353
    %357 = vst [vmem:[#allocation2] sm:$0xf] %v356
    // Predicated region
    $region22: #{tpu_custom_call.1} parent=1 // pred_check
      _
    $region23: #{tpu_custom_call.1} parent=1 // pred_check_branch
      %359 = sbr.rel (0) target = $region25
    $region24: #{tpu_custom_call.1} parent=1 // pred_region
      %s361 = ssub.s32 64, 64
      %362 = vsyncadd [#allocation3], %s361
      %s364 = sshll.u32 [#allocation2], 4
      %s365 = int_to_ptr.vmem [resolvable:$true] %s364
      %367 = dma.vmem_to_hbm [thread:$0]  %s365, 64, %s5, [#allocation3]
    $region25: #{tpu_custom_call.1} parent=1 // pred_fallthru
      _
    // Predicated region
    $region26: #{tpu_custom_call.1} parent=1 // pred_check
      _
    $region27: #{tpu_custom_call.1} parent=1 // pred_check_branch
      %369 = sbr.rel (0) target = $region29
    $region28: #{tpu_custom_call.1} parent=1 // pred_region
      %370 = dma.done [#allocation3], 64
    $region29: #{tpu_custom_call.1} parent=1 // pred_fallthru
      _
    %371 = vsyncpa [#allocation3], 1

</llo_original>
